<compile_context>
chip_gen: v7x
topology: tpu7x:2x2x1
jax: 0.10.0
libtpu: 0.0.40
codegen_flags: <defaults>
</compile_context>

<pallas_src>
import functools

import jax
import jax.numpy as jnp
import numpy as np
from jax.experimental import pallas as pl
from jax.experimental.pallas import tpu as pltpu

LANES = 128      # camera lane axis (fast axis of a vreg)
MAX_SUB = 64     # sublane rows per grid step -> up to 64*128 = 8192 cameras/step


def _exp_map_so3xr3_kernel(tan_ref, out_ref):
    """tan_ref: (6, BSUB, 128) f32, out_ref: (12, BSUB, 128) f32.

    Component layout on axis 0 of tan_ref: [tx, ty, tz, wx, wy, wz].
    Output layout on axis 0 of out_ref: row-major 3x4 entries
    [r00, r01, r02, tx, r10, r11, r12, ty, r20, r21, r22, tz].
    """
    tx = tan_ref[0]
    ty = tan_ref[1]
    tz = tan_ref[2]
    wx = tan_ref[3]
    wy = tan_ref[4]
    wz = tan_ref[5]

    theta2 = wx * wx + wy * wy + wz * wz
    theta = jnp.sqrt(theta2)
    near_zero = theta < 1e-2
    one = jnp.ones_like(theta)
    theta_nz = jnp.where(near_zero, one, theta)
    inv_t = 1.0 / theta_nz                       # single exact divide, reused

    cosine = jnp.where(near_zero, 8.0 / (4.0 + theta2) - 1.0, jnp.cos(theta))
    sine_by_theta = jnp.where(near_zero, 0.5 * cosine + 0.5,
                              jnp.sin(theta) * inv_t)
    one_minus_cos_by_t2 = jnp.where(near_zero, 0.5 * sine_by_theta,
                                    (1.0 - cosine) * (inv_t * inv_t))

    # Factor shared products once.
    owx = one_minus_cos_by_t2 * wx
    owy = one_minus_cos_by_t2 * wy
    owz = one_minus_cos_by_t2 * wz
    swx = sine_by_theta * wx
    swy = sine_by_theta * wy
    swz = sine_by_theta * wz

    # Direct full-tile stores (no cross-sublane concatenate).
    out_ref[0] = owx * wx + cosine     # r00
    out_ref[1] = owx * wy - swz        # r01
    out_ref[2] = owx * wz + swy        # r02
    out_ref[3] = tx
    out_ref[4] = owy * wx + swz        # r10
    out_ref[5] = owy * wy + cosine     # r11
    out_ref[6] = owy * wz - swx        # r12
    out_ref[7] = ty
    out_ref[8] = owz * wx - swy        # r20
    out_ref[9] = owz * wy + swx        # r21
    out_ref[10] = owz * wz + cosine    # r22
    out_ref[11] = tz


def _exp_map_so3xr3_pallas(tangent_6xn):
    """tangent_6xn: (6, N) f32 [tx,ty,tz,wx,wy,wz] -> (N, 3, 4) f32."""
    n = tangent_6xn.shape[1]
    rows = pl.cdiv(max(n, 1), LANES)                  # sublane rows of cameras
    bsub = min(MAX_SUB, ((rows + 7) // 8) * 8)        # multiple of 8 sublanes
    rows_pad = pl.cdiv(rows, bsub) * bsub
    npad = rows_pad * LANES

    tan = jnp.pad(tangent_6xn.astype(jnp.float32), ((0, 0), (0, npad - n)))
    tan = tan.reshape(6, rows_pad, LANES)             # camera k -> (k//128, k%128)

    out = pl.pallas_call(
        _exp_map_so3xr3_kernel,
        out_shape=jax.ShapeDtypeStruct((12, rows_pad, LANES), jnp.float32),
        grid=(rows_pad // bsub,),
        in_specs=[pl.BlockSpec((6, bsub, LANES), lambda i: (0, i, 0))],
        out_specs=pl.BlockSpec((12, bsub, LANES), lambda i: (0, i, 0)),
        compiler_params=pltpu.CompilerParams(dimension_semantics=("parallel",)),
    )(tan)

    # (12, rows_pad, 128) -> (12, npad) -> (12, n) -> (n, 12) -> (n, 3, 4)
    return out.reshape(12, npad)[:, :n].T.reshape(n, 3, 4)


@jax.jit
def _forward_so3xr3(pose_adjustment_t, indices):
    """pose_adjustment_t: (6, num_cameras); indices: (N,) int -> (N, 3, 4)."""
    tangent_6xn = jnp.take(pose_adjustment_t, indices, axis=1)   # gather (glue)
    return _exp_map_so3xr3_pallas(tangent_6xn)                   # hot path


class CameraOptimizerJAX:
    """JAX/Pallas re-implementation of CameraOptimizer (forward pass only)."""

    def __init__(self, num_cameras, mode="SO3xR3",
                 non_trainable_camera_indices=None, key=None):
        self.num_cameras = num_cameras
        self.mode = mode
        self.non_trainable_camera_indices = non_trainable_camera_indices
        if mode in ("SO3xR3", "SE3"):
            # torch init is zeros((num_cameras, 6)); use small deterministic
            # random values so the exp-map path is actually exercised.
            if key is None:
                key = jax.random.PRNGKey(0)
            self.pose_adjustment = 0.1 * jax.random.normal(
                key, (num_cameras, 6), dtype=jnp.float32)
            # Transposed copy so the per-call gather is lane-friendly glue.
            self._pose_adjustment_t = self.pose_adjustment.T     # (6, num_cameras)
        elif mode == "off":
            self.pose_adjustment = None
        else:
            raise ValueError(mode)

    def __call__(self, indices):
        n = indices.shape[0]
        if self.mode == "off":
            return jnp.tile(jnp.eye(4, dtype=jnp.float32)[None, :3, :4], (n, 1, 1))
        if self.mode == "SE3":
            # TODO(synk): SE3 exp map (left Jacobian applied to translation) not implemented.
            raise NotImplementedError("SE3 mode not implemented in Pallas port")
        mats = _forward_so3xr3(self._pose_adjustment_t, indices)
        if self.non_trainable_camera_indices is not None:
            eye34 = jnp.eye(4, dtype=mats.dtype)[:3, :4]
            # Matches torch semantics: outputs[non_trainable_idx] = eye (positional
            # index into the batch).  NOTE: JAX silently drops out-of-bounds
            # scatter indices where torch would raise.
            mats = mats.at[self.non_trainable_camera_indices].set(eye34)
        return mats


def _exp_map_so3xr3_ref(tv):
    """Pure-jnp reference of nerfstudio exp_map_SO3xR3 for validation."""
    t = tv[:, :3]
    w = tv[:, 3:]
    theta2 = jnp.sum(w * w, axis=-1, keepdims=True)
    theta = jnp.sqrt(theta2)
    near_zero = theta < 1e-2
    theta_nz = jnp.where(near_zero, 1.0, theta)
    theta2_nz = jnp.where(near_zero, 1.0, theta2)
    cosine = jnp.where(near_zero, 8.0 / (4.0 + theta2) - 1.0, jnp.cos(theta))
    sbt = jnp.where(near_zero, 0.5 * cosine + 0.5, jnp.sin(theta) / theta_nz)
    omc = jnp.where(near_zero, 0.5 * sbt, (1.0 - cosine) / theta2_nz)
    R = omc[..., None] * w[:, :, None] * w[:, None, :]
    R = R + cosine[..., None] * jnp.eye(3, dtype=tv.dtype)[None]
    sw = sbt * w
    zeros = jnp.zeros_like(sw[:, 0])
    skew = jnp.stack([
        jnp.stack([zeros, -sw[:, 2], sw[:, 1]], axis=-1),
        jnp.stack([sw[:, 2], zeros, -sw[:, 0]], axis=-1),
        jnp.stack([-sw[:, 1], sw[:, 0], zeros], axis=-1),
    ], axis=1)
    R = R + skew
    return jnp.concatenate([R, t[:, :, None]], axis=-1)


if __name__ == "__main__":
    key = jax.random.PRNGKey(0)
    k_param, k_idx, k_param2, k_idx2 = jax.random.split(key, 4)

    # Small shapes consistent with the module.
    num_cameras = 16
    opt = CameraOptimizerJAX(num_cameras, mode="SO3xR3", key=k_param)

    indices = jax.random.randint(k_idx, (8,), 0, num_cameras, dtype=jnp.int32)
    out = opt(indices)
    out = jax.block_until_ready(out)
    assert out.shape == (8, 3, 4), out.shape

    ref = _exp_map_so3xr3_ref(opt.pose_adjustment[indices])
    np.testing.assert_allclose(np.asarray(out), np.asarray(ref), atol=1e-5, rtol=1e-5)

    # A second, larger batch to exercise multi-row (sublane-dense) packing.
    num_cameras2 = 64
    opt2 = CameraOptimizerJAX(num_cameras2, mode="SO3xR3", key=k_param2)
    indices2 = jax.random.randint(k_idx2, (300,), 0, num_cameras2, dtype=jnp.int32)
    out2 = jax.block_until_ready(opt2(indices2))
    assert out2.shape == (300, 3, 4), out2.shape
    ref2 = _exp_map_so3xr3_ref(opt2.pose_adjustment[indices2])
    np.testing.assert_allclose(np.asarray(out2), np.asarray(ref2), atol=1e-5, rtol=1e-5)

    # Non-trainable override path.
    opt_nt = CameraOptimizerJAX(num_cameras, mode="SO3xR3", key=k_param,
                                non_trainable_camera_indices=jnp.array([0, 3]))
    out_nt = jax.block_until_ready(opt_nt(indices))
    np.testing.assert_allclose(np.asarray(out_nt[0]),
                               np.eye(4, dtype=np.float32)[:3, :4], atol=0, rtol=0)

    # 'off' mode sanity check (identity tile, no Pallas needed).
    opt_off = CameraOptimizerJAX(num_cameras, mode="off")
    out_off = jax.block_until_ready(opt_off(indices))
    assert out_off.shape == (8, 3, 4)

    print("KERNEL_OK")
</pallas_src>

<mosaic_0001>
module attributes {stable_mosaic.version = 11 : i64} {
  func.func @_exp_map_so3xr3_kernel(%arg0: i32, %arg1: memref<6x8x128xf32, #tpu.memory_space<vmem>>, %arg2: memref<12x8x128xf32, #tpu.memory_space<vmem>>) attributes {dimension_semantics = [#tpu.dimension_semantics<parallel>], iteration_bounds = array<i64: 1>, scalar_prefetch = 0 : i64, scratch_operands = 0 : i64, tpu.core_type = #tpu.core_type<tc>, window_params = [{transform_indices = @transform_0, window_bounds = array<i64: 6, 8, 128>}, {transform_indices = @transform_1, window_bounds = array<i64: 12, 8, 128>}]} {
    %c0 = arith.constant 0 : index
    %c0_0 = arith.constant 0 : index
    %c0_1 = arith.constant 0 : index
    %0 = vector.load %arg1[%c0, %c0_0, %c0_1] : memref<6x8x128xf32, #tpu.memory_space<vmem>>, vector<1x8x128xf32>
    %1 = vector.shape_cast %0 : vector<1x8x128xf32> to vector<8x128xf32>
    %c1 = arith.constant 1 : index
    %c0_2 = arith.constant 0 : index
    %c0_3 = arith.constant 0 : index
    %2 = vector.load %arg1[%c1, %c0_2, %c0_3] : memref<6x8x128xf32, #tpu.memory_space<vmem>>, vector<1x8x128xf32>
    %3 = vector.shape_cast %2 : vector<1x8x128xf32> to vector<8x128xf32>
    %c2 = arith.constant 2 : index
    %c0_4 = arith.constant 0 : index
    %c0_5 = arith.constant 0 : index
    %4 = vector.load %arg1[%c2, %c0_4, %c0_5] : memref<6x8x128xf32, #tpu.memory_space<vmem>>, vector<1x8x128xf32>
    %5 = vector.shape_cast %4 : vector<1x8x128xf32> to vector<8x128xf32>
    %c3 = arith.constant 3 : index
    %c0_6 = arith.constant 0 : index
    %c0_7 = arith.constant 0 : index
    %6 = vector.load %arg1[%c3, %c0_6, %c0_7] : memref<6x8x128xf32, #tpu.memory_space<vmem>>, vector<1x8x128xf32>
    %7 = vector.shape_cast %6 : vector<1x8x128xf32> to vector<8x128xf32>
    %c4 = arith.constant 4 : index
    %c0_8 = arith.constant 0 : index
    %c0_9 = arith.constant 0 : index
    %8 = vector.load %arg1[%c4, %c0_8, %c0_9] : memref<6x8x128xf32, #tpu.memory_space<vmem>>, vector<1x8x128xf32>
    %9 = vector.shape_cast %8 : vector<1x8x128xf32> to vector<8x128xf32>
    %c5 = arith.constant 5 : index
    %c0_10 = arith.constant 0 : index
    %c0_11 = arith.constant 0 : index
    %10 = vector.load %arg1[%c5, %c0_10, %c0_11] : memref<6x8x128xf32, #tpu.memory_space<vmem>>, vector<1x8x128xf32>
    %11 = vector.shape_cast %10 : vector<1x8x128xf32> to vector<8x128xf32>
    %12 = arith.mulf %7, %7 : vector<8x128xf32>
    %13 = arith.mulf %9, %9 : vector<8x128xf32>
    %14 = arith.addf %12, %13 : vector<8x128xf32>
    %15 = arith.mulf %11, %11 : vector<8x128xf32>
    %16 = arith.addf %14, %15 : vector<8x128xf32>
    %17 = math.sqrt %16 : vector<8x128xf32>
    %cst = arith.constant 0.00999999977 : f32
    %18 = vector.broadcast %cst : f32 to vector<8x128xf32>
    %19 = arith.cmpf olt, %17, %18 : vector<8x128xf32>
    %cst_12 = arith.constant 1.000000e+00 : f32
    %20 = vector.broadcast %cst_12 : f32 to vector<8x128xf32>
    %21 = arith.select %19, %20, %17 : vector<8x128xi1>, vector<8x128xf32>
    %cst_13 = arith.constant 1.000000e+00 : f32
    %22 = vector.broadcast %cst_13 : f32 to vector<8x128xf32>
    %23 = arith.divf %22, %21 : vector<8x128xf32>
    %cst_14 = arith.constant 4.000000e+00 : f32
    %24 = vector.broadcast %cst_14 : f32 to vector<8x128xf32>
    %25 = arith.addf %24, %16 : vector<8x128xf32>
    %cst_15 = arith.constant 8.000000e+00 : f32
    %26 = vector.broadcast %cst_15 : f32 to vector<8x128xf32>
    %27 = arith.divf %26, %25 : vector<8x128xf32>
    %cst_16 = arith.constant 1.000000e+00 : f32
    %28 = vector.broadcast %cst_16 : f32 to vector<8x128xf32>
    %29 = arith.subf %27, %28 : vector<8x128xf32>
    %30 = math.cos %17 : vector<8x128xf32>
    %31 = arith.select %19, %29, %30 : vector<8x128xi1>, vector<8x128xf32>
    %cst_17 = arith.constant 5.000000e-01 : f32
    %32 = vector.broadcast %cst_17 : f32 to vector<8x128xf32>
    %33 = arith.mulf %32, %31 : vector<8x128xf32>
    %cst_18 = arith.constant 5.000000e-01 : f32
    %34 = vector.broadcast %cst_18 : f32 to vector<8x128xf32>
    %35 = arith.addf %33, %34 : vector<8x128xf32>
    %36 = math.sin %17 : vector<8x128xf32>
    %37 = arith.mulf %36, %23 : vector<8x128xf32>
    %38 = arith.select %19, %35, %37 : vector<8x128xi1>, vector<8x128xf32>
    %cst_19 = arith.constant 5.000000e-01 : f32
    %39 = vector.broadcast %cst_19 : f32 to vector<8x128xf32>
    %40 = arith.mulf %39, %38 : vector<8x128xf32>
    %cst_20 = arith.constant 1.000000e+00 : f32
    %41 = vector.broadcast %cst_20 : f32 to vector<8x128xf32>
    %42 = arith.subf %41, %31 : vector<8x128xf32>
    %43 = arith.mulf %23, %23 : vector<8x128xf32>
    %44 = arith.mulf %42, %43 : vector<8x128xf32>
    %45 = arith.select %19, %40, %44 : vector<8x128xi1>, vector<8x128xf32>
    %46 = arith.mulf %45, %7 : vector<8x128xf32>
    %47 = arith.mulf %45, %9 : vector<8x128xf32>
    %48 = arith.mulf %45, %11 : vector<8x128xf32>
    %49 = arith.mulf %38, %7 : vector<8x128xf32>
    %50 = arith.mulf %38, %9 : vector<8x128xf32>
    %51 = arith.mulf %38, %11 : vector<8x128xf32>
    %52 = arith.mulf %46, %7 : vector<8x128xf32>
    %53 = arith.addf %52, %31 : vector<8x128xf32>
    %c0_21 = arith.constant 0 : index
    %c0_22 = arith.constant 0 : index
    %c0_23 = arith.constant 0 : index
    %54 = vector.load %arg2[%c0_21, %c0_22, %c0_23] : memref<12x8x128xf32, #tpu.memory_space<vmem>>, vector<1x8x128xf32>
    %55 = vector.shape_cast %54 : vector<1x8x128xf32> to vector<8x128xf32>
    %56 = vector.shape_cast %53 : vector<8x128xf32> to vector<1x8x128xf32>
    tpu.vector_store %arg2[%c0_21, %c0_22, %c0_23], %56 {strides = array<i32>} : memref<12x8x128xf32, #tpu.memory_space<vmem>>, vector<1x8x128xf32>,
    %57 = arith.mulf %46, %9 : vector<8x128xf32>
    %58 = arith.subf %57, %51 : vector<8x128xf32>
    %c1_24 = arith.constant 1 : index
    %c0_25 = arith.constant 0 : index
    %c0_26 = arith.constant 0 : index
    %59 = vector.load %arg2[%c1_24, %c0_25, %c0_26] : memref<12x8x128xf32, #tpu.memory_space<vmem>>, vector<1x8x128xf32>
    %60 = vector.shape_cast %59 : vector<1x8x128xf32> to vector<8x128xf32>
    %61 = vector.shape_cast %58 : vector<8x128xf32> to vector<1x8x128xf32>
    tpu.vector_store %arg2[%c1_24, %c0_25, %c0_26], %61 {strides = array<i32>} : memref<12x8x128xf32, #tpu.memory_space<vmem>>, vector<1x8x128xf32>,
    %62 = arith.mulf %46, %11 : vector<8x128xf32>
    %63 = arith.addf %62, %50 : vector<8x128xf32>
    %c2_27 = arith.constant 2 : index
    %c0_28 = arith.constant 0 : index
    %c0_29 = arith.constant 0 : index
    %64 = vector.load %arg2[%c2_27, %c0_28, %c0_29] : memref<12x8x128xf32, #tpu.memory_space<vmem>>, vector<1x8x128xf32>
    %65 = vector.shape_cast %64 : vector<1x8x128xf32> to vector<8x128xf32>
    %66 = vector.shape_cast %63 : vector<8x128xf32> to vector<1x8x128xf32>
    tpu.vector_store %arg2[%c2_27, %c0_28, %c0_29], %66 {strides = array<i32>} : memref<12x8x128xf32, #tpu.memory_space<vmem>>, vector<1x8x128xf32>,
    %c3_30 = arith.constant 3 : index
    %c0_31 = arith.constant 0 : index
    %c0_32 = arith.constant 0 : index
    %67 = vector.load %arg2[%c3_30, %c0_31, %c0_32] : memref<12x8x128xf32, #tpu.memory_space<vmem>>, vector<1x8x128xf32>
    %68 = vector.shape_cast %67 : vector<1x8x128xf32> to vector<8x128xf32>
    %69 = vector.shape_cast %1 : vector<8x128xf32> to vector<1x8x128xf32>
    tpu.vector_store %arg2[%c3_30, %c0_31, %c0_32], %69 {strides = array<i32>} : memref<12x8x128xf32, #tpu.memory_space<vmem>>, vector<1x8x128xf32>,
    %70 = arith.mulf %47, %7 : vector<8x128xf32>
    %71 = arith.addf %70, %51 : vector<8x128xf32>
    %c4_33 = arith.constant 4 : index
    %c0_34 = arith.constant 0 : index
    %c0_35 = arith.constant 0 : index
    %72 = vector.load %arg2[%c4_33, %c0_34, %c0_35] : memref<12x8x128xf32, #tpu.memory_space<vmem>>, vector<1x8x128xf32>
    %73 = vector.shape_cast %72 : vector<1x8x128xf32> to vector<8x128xf32>
    %74 = vector.shape_cast %71 : vector<8x128xf32> to vector<1x8x128xf32>
    tpu.vector_store %arg2[%c4_33, %c0_34, %c0_35], %74 {strides = array<i32>} : memref<12x8x128xf32, #tpu.memory_space<vmem>>, vector<1x8x128xf32>,
    %75 = arith.mulf %47, %9 : vector<8x128xf32>
    %76 = arith.addf %75, %31 : vector<8x128xf32>
    %c5_36 = arith.constant 5 : index
    %c0_37 = arith.constant 0 : index
    %c0_38 = arith.constant 0 : index
    %77 = vector.load %arg2[%c5_36, %c0_37, %c0_38] : memref<12x8x128xf32, #tpu.memory_space<vmem>>, vector<1x8x128xf32>
    %78 = vector.shape_cast %77 : vector<1x8x128xf32> to vector<8x128xf32>
    %79 = vector.shape_cast %76 : vector<8x128xf32> to vector<1x8x128xf32>
    tpu.vector_store %arg2[%c5_36, %c0_37, %c0_38], %79 {strides = array<i32>} : memref<12x8x128xf32, #tpu.memory_space<vmem>>, vector<1x8x128xf32>,
    %80 = arith.mulf %47, %11 : vector<8x128xf32>
    %81 = arith.subf %80, %49 : vector<8x128xf32>
    %c6 = arith.constant 6 : index
    %c0_39 = arith.constant 0 : index
    %c0_40 = arith.constant 0 : index
    %82 = vector.load %arg2[%c6, %c0_39, %c0_40] : memref<12x8x128xf32, #tpu.memory_space<vmem>>, vector<1x8x128xf32>
    %83 = vector.shape_cast %82 : vector<1x8x128xf32> to vector<8x128xf32>
    %84 = vector.shape_cast %81 : vector<8x128xf32> to vector<1x8x128xf32>
    tpu.vector_store %arg2[%c6, %c0_39, %c0_40], %84 {strides = array<i32>} : memref<12x8x128xf32, #tpu.memory_space<vmem>>, vector<1x8x128xf32>,
    %c7 = arith.constant 7 : index
    %c0_41 = arith.constant 0 : index
    %c0_42 = arith.constant 0 : index
    %85 = vector.load %arg2[%c7, %c0_41, %c0_42] : memref<12x8x128xf32, #tpu.memory_space<vmem>>, vector<1x8x128xf32>
    %86 = vector.shape_cast %85 : vector<1x8x128xf32> to vector<8x128xf32>
    %87 = vector.shape_cast %3 : vector<8x128xf32> to vector<1x8x128xf32>
    tpu.vector_store %arg2[%c7, %c0_41, %c0_42], %87 {strides = array<i32>} : memref<12x8x128xf32, #tpu.memory_space<vmem>>, vector<1x8x128xf32>,
    %88 = arith.mulf %48, %7 : vector<8x128xf32>
    %89 = arith.subf %88, %50 : vector<8x128xf32>
    %c8 = arith.constant 8 : index
    %c0_43 = arith.constant 0 : index
    %c0_44 = arith.constant 0 : index
    %90 = vector.load %arg2[%c8, %c0_43, %c0_44] : memref<12x8x128xf32, #tpu.memory_space<vmem>>, vector<1x8x128xf32>
    %91 = vector.shape_cast %90 : vector<1x8x128xf32> to vector<8x128xf32>
    %92 = vector.shape_cast %89 : vector<8x128xf32> to vector<1x8x128xf32>
    tpu.vector_store %arg2[%c8, %c0_43, %c0_44], %92 {strides = array<i32>} : memref<12x8x128xf32, #tpu.memory_space<vmem>>, vector<1x8x128xf32>,
    %93 = arith.mulf %48, %9 : vector<8x128xf32>
    %94 = arith.addf %93, %49 : vector<8x128xf32>
    %c9 = arith.constant 9 : index
    %c0_45 = arith.constant 0 : index
    %c0_46 = arith.constant 0 : index
    %95 = vector.load %arg2[%c9, %c0_45, %c0_46] : memref<12x8x128xf32, #tpu.memory_space<vmem>>, vector<1x8x128xf32>
    %96 = vector.shape_cast %95 : vector<1x8x128xf32> to vector<8x128xf32>
    %97 = vector.shape_cast %94 : vector<8x128xf32> to vector<1x8x128xf32>
    tpu.vector_store %arg2[%c9, %c0_45, %c0_46], %97 {strides = array<i32>} : memref<12x8x128xf32, #tpu.memory_space<vmem>>, vector<1x8x128xf32>,
    %98 = arith.mulf %48, %11 : vector<8x128xf32>
    %99 = arith.addf %98, %31 : vector<8x128xf32>
    %c10 = arith.constant 10 : index
    %c0_47 = arith.constant 0 : index
    %c0_48 = arith.constant 0 : index
    %100 = vector.load %arg2[%c10, %c0_47, %c0_48] : memref<12x8x128xf32, #tpu.memory_space<vmem>>, vector<1x8x128xf32>
    %101 = vector.shape_cast %100 : vector<1x8x128xf32> to vector<8x128xf32>
    %102 = vector.shape_cast %99 : vector<8x128xf32> to vector<1x8x128xf32>
    tpu.vector_store %arg2[%c10, %c0_47, %c0_48], %102 {strides = array<i32>} : memref<12x8x128xf32, #tpu.memory_space<vmem>>, vector<1x8x128xf32>,
    %c11 = arith.constant 11 : index
    %c0_49 = arith.constant 0 : index
    %c0_50 = arith.constant 0 : index
    %103 = vector.load %arg2[%c11, %c0_49, %c0_50] : memref<12x8x128xf32, #tpu.memory_space<vmem>>, vector<1x8x128xf32>
    %104 = vector.shape_cast %103 : vector<1x8x128xf32> to vector<8x128xf32>
    %105 = vector.shape_cast %5 : vector<8x128xf32> to vector<1x8x128xf32>
    tpu.vector_store %arg2[%c11, %c0_49, %c0_50], %105 {strides = array<i32>} : memref<12x8x128xf32, #tpu.memory_space<vmem>>, vector<1x8x128xf32>,
    return
  }
  func.func @transform_0(%arg0: i32) -> (i32, i32, i32) {
    %c0_i32 = arith.constant 0 : i32
    %c0_i32_0 = arith.constant 0 : i32
    %c0_i32_1 = arith.constant 0 : i32
    return %c0_i32, %arg0, %c0_i32_0 : i32, i32, i32
  }
  func.func @transform_1(%arg0: i32) -> (i32, i32, i32) {
    %c0_i32 = arith.constant 0 : i32
    %c0_i32_0 = arith.constant 0 : i32
    %c0_i32_1 = arith.constant 0 : i32
    return %c0_i32, %arg0, %c0_i32_0 : i32, i32, i32
  }
}

</mosaic_0001>

<llo_original>
// kernel: _forward_so3xr3.1
$region0: #{_forward_so3xr3.1}
  #allocation0 [shape = 'u32[]', space=smem, size = 0x4, offset = 0x4, fixed_abs, tag = 'smem constant byte address 0x4 - core index']
  #allocation1 [shape = 'u32[144,128]{1,0:T(1,128)}', space=vmem, size = 0x12000, scoped, tag = 'internal scratch']
  %s0 = inlined_call_operand.vmem [shape: f32[6,8,128], index: 0, kind: input, shape index: {}]
  %s1 = inlined_call_operand.vmem [shape: f32[12,8,128], index: 1, kind: output, shape index: {}]
  %s2 = sld [smem:[#allocation0]]
  $region14: #{_forward_so3xr3.1} parent=0
    _
  %s4 = ssub.s32 1, %s2
  %s5 = scalar_select 0, %s4, %s2
  // Predicated region
  $region2: #{_forward_so3xr3.1} parent=0 // pred_check
    _
  $region3: #{_forward_so3xr3.1} parent=0 // pred_check_branch
    %7 = sbr.rel (0) target = $region5
  $region4: #{_forward_so3xr3.1} parent=0 // pred_region
    _
  $region5: #{_forward_so3xr3.1} parent=0 // pred_fallthru
    _
  %v8 = vld [vmem:[%s0] sm:$0xff]
  %s9 = scalar_lea.vmem %s0, 8
  %v10 = vld [vmem:[%s9] sm:$0xff]
  %s11 = scalar_lea.vmem %s0, 16
  %v12 = vld [vmem:[%s11] sm:$0xff]
  %s13 = scalar_lea.vmem %s0, 24
  %v14 = vld [vmem:[%s13] sm:$0xff]
  %s15 = scalar_lea.vmem %s0, 32
  %v16 = vld [vmem:[%s15] sm:$0xff]
  %s17 = scalar_lea.vmem %s0, 40
  %v18 = vld [vmem:[%s17] sm:$0xff]
  %v19 = vmul.f32 %v14, %v14
  %v20 = vmul.f32 %v16, %v16
  %v21 = vadd.f32 %v19, %v20
  %v22 = vmul.f32 %v18, %v18
  %v23 = vadd.f32 %v21, %v22
  %v24 = vrsqrt.pop %v23
  %v25 = vmul.f32 %v23, %v24
  %vm26 = vcmp.eq.f32.partialorder %v23, inf
  %v27 = vsel %vm26, %v23, %v25
  %vm28 = vcmp.eq.f32.partialorder %v23, 0.0
  %v29 = vand.u32 %v23, 2147483648
  %v30 = vsel %vm28, %v29, %v27
  %vm31 = vcmp.lt.f32.partialorder %v30, 0.01
  %v32 = vsel %vm31, 1.0, %v30
  %v33 = vrcp.pop %v32
  %v34 = vmul.f32 1.0, %v33
  %v35 = vadd.f32 %v23, 4.0
  %v36 = vrcp.pop %v35
  %v37 = vmul.f32 8.0, %v36
  %v38 = vsub.f32 %v37, 1.0
  %v39 = vand.u32 2147483647, %v30
  %vm40 = vcmp.le.f32.partialorder %v39, 0.7853982
  %vm41 = vcmp.lt.s32.totalorder %v30, 0
  %v42 = vand.u32 %v30, 2139095040
  %v43 = vshrl.u32 %v42, 23
  %v44 = vsub.s32 %v43, 127
  %v45 = vand.u32 2147483647, %v30
  %v46 = vand.u32 %v45, 8388607
  %v47 = vor.u32 %v46, 8388608
  %v48 = vsub.s32 0, %v47
  %v49 = vadd.s32 %v44, 1
  %vm50 = vcmp.gt.s32.totalorder %v49, 0
  %v51 = vsel %vm50, %v49, 0
  %v52 = vshrl.u32 %v51, 5
  %v53 = vand.u32 %v51, 31
  %v54 = vsub.s32 32, %v53
  %v55 = vshrl.u32 683565275, %v54
  %v56 = vshll.u32 683565275, %v53
  %v57 = vshrl.u32 2475754826, %v54
  %v58 = vor.u32 %v56, %v57
  %v59 = vshll.u32 2475754826, %v53
  %v60 = vshrl.u32 2131351028, %v54
  %v61 = vor.u32 %v59, %v60
  %v62 = vshll.u32 2131351028, %v53
  %v63 = vshrl.u32 2102212464, %v54
  %v64 = vor.u32 %v62, %v63
  %v65 = vshll.u32 2102212464, %v53
  %v66 = vshrl.u32 920167782, %v54
  %v67 = vor.u32 %v65, %v66
  %v68 = vshll.u32 920167782, %v53
  %v69 = vshrl.u32 1326507024, %v54
  %v70 = vor.u32 %v68, %v69
  %vm71 = vcmp.lt.s32.totalorder %v52, 1
  %vm72 = vcmp.lt.s32.totalorder %v52, 2
  %vm73 = vcmp.lt.s32.totalorder %v52, 3
  %vm74 = vcmp.lt.s32.totalorder %v52, 4
  %v75 = vsel %vm71, %v55, %v58
  %v76 = vsel %vm74, %v64, 2102212464
  %v77 = vsel %vm73, %v61, %v76
  %v78 = vsel %vm72, %v75, %v77
  %v79 = vsel %vm71, %v58, %v61
  %v80 = vsel %vm74, %v67, 920167782
  %v81 = vsel %vm73, %v64, %v80
  %v82 = vsel %vm72, %v79, %v81
  %v83 = vsel %vm71, %v61, %v64
  %v84 = vsel %vm74, %v70, 1326507024
  %v85 = vsel %vm73, %v67, %v84
  %v86 = vsel %vm72, %v83, %v85
  %v87 = vshll.u32 %v47, 8
  %v88 = vmul.u32.u64.compose %v87, %v86
  %v89 = vextract.low.u32 %v88
  %v90 = vextract.high.u32 %v88
  %v91 = vmul.u32.u64.compose %v87, %v82
  %v92 = vextract.low.u32 %v91
  %v93 = vextract.high.u32 %v91
  %v94 = vmul.u32 %v87, %v78
  %v95 = vadd.s32 %v90, %v92
  %vm96 = vc.u32 %v90, %v92
  %v97 = vadd.s32 %v93, 1
  %v98 = vsel %vm96, %v97, %v93
  %v99 = vadd.s32 %v94, %v98
  %v100 = vadd.s32 %v99, 536870912
  %v101 = vshrl.u32 %v100, 30
  %v102 = vshll.u32 %v101, 30
  %v103 = vsub.s32 %v99, %v102
  %vm104 = vcmp.lt.s32.totalorder %v103, 0
  %v105 = vsub.s32 0, %v103
  %v106 = vsel %vm104, %v105, %v103
  %v107 = vclz %v106
  %v108 = vsub.s32 %v107, 2
  %vm109 = vcmp.gt.s32.totalorder 0, %v108
  %v110 = vsel %vm109, 0, %v108
  %v111 = vsub.s32 32, %v110
  %v112 = vshll.u32 %v103, %v110
  %v113 = vshrl.u32 %v95, %v111
  %v114 = vor.u32 %v112, %v113
  %v115 = vsub.s32 4294967266, %v110
  %v116 = vadd.s32 %v115, 127
  %v117 = vshll.u32 %v116, 23
  %v118 = vor.u32 4788187, %v117
  %v119 = vand.u32 2147483647, %v118
  %v121 = vcvt.s32.f32 %v114
  %v122 = vmul.f32 %v121, %v119
  %v123 = vxor.u32 %v122, 2147483648
  %v124 = vsel %vm41, %v123, %v122
  %v125 = vsub.s32 4, %v101
  %v126 = vsel %vm41, %v125, %v101
  %v127 = vsel %vm40, %v30, %v124
  %v128 = vsel %vm40, 0, %v126
  %v129 = vcosq.f32.pop %v127
  %v130 = vsinq.f32.pop %v127
  %vm131 = vweird.f32 %v30
  %v132 = vand.u32 %v128, 3
  %vm133 = vcmp.lt.s32.totalorder %v132, 2
  %vm134 = vcmp.eq.s32.totalorder %v132, 0
  %v135 = vxor.u32 %v130, 2147483648
  %v136 = vsel %vm134, %v129, %v135
  %vm137 = vcmp.eq.s32.totalorder %v132, 2
  %v138 = vxor.u32 %v129, 2147483648
  %v139 = vsel %vm137, %v138, %v130
  %v140 = vsel %vm133, %v136, %v139
  %v141 = vsel %vm131, nan, %v140
  %v142 = vsel %vm31, %v38, %v141
  %v143 = vmul.f32 %v142, 0.5
  %v144 = vadd.f32 %v143, 0.5
  %v145 = vand.u32 2147483647, %v30
  %vm146 = vcmp.le.f32.partialorder %v145, 0.7853982
  %vm147 = vcmp.lt.s32.totalorder %v30, 0
  %v148 = vand.u32 %v30, 2139095040
  %v149 = vshrl.u32 %v148, 23
  %v150 = vsub.s32 %v149, 127
  %v151 = vand.u32 2147483647, %v30
  %v152 = vand.u32 %v151, 8388607
  %v153 = vor.u32 %v152, 8388608
  %v154 = vsub.s32 0, %v153
  %v155 = vadd.s32 %v150, 1
  %vm156 = vcmp.gt.s32.totalorder %v155, 0
  %v157 = vsel %vm156, %v155, 0
  %v158 = vshrl.u32 %v157, 5
  %v159 = vand.u32 %v157, 31
  %v160 = vsub.s32 32, %v159
  %v161 = vshrl.u32 683565275, %v160
  %v162 = vshll.u32 683565275, %v159
  %v163 = vshrl.u32 2475754826, %v160
  %v164 = vor.u32 %v162, %v163
  %v165 = vshll.u32 2475754826, %v159
  %v166 = vshrl.u32 2131351028, %v160
  %v167 = vor.u32 %v165, %v166
  %v168 = vshll.u32 2131351028, %v159
  %v169 = vshrl.u32 2102212464, %v160
  %v170 = vor.u32 %v168, %v169
  %v171 = vshll.u32 2102212464, %v159
  %v172 = vshrl.u32 920167782, %v160
  %v173 = vor.u32 %v171, %v172
  %v174 = vshll.u32 920167782, %v159
  %v175 = vshrl.u32 1326507024, %v160
  %v176 = vor.u32 %v174, %v175
  %vm177 = vcmp.lt.s32.totalorder %v158, 1
  %vm178 = vcmp.lt.s32.totalorder %v158, 2
  %vm179 = vcmp.lt.s32.totalorder %v158, 3
  %vm180 = vcmp.lt.s32.totalorder %v158, 4
  %v181 = vsel %vm177, %v161, %v164
  %v182 = vsel %vm180, %v170, 2102212464
  %v183 = vsel %vm179, %v167, %v182
  %v184 = vsel %vm178, %v181, %v183
  %v185 = vsel %vm177, %v164, %v167
  %v186 = vsel %vm180, %v173, 920167782
  %v187 = vsel %vm179, %v170, %v186
  %v188 = vsel %vm178, %v185, %v187
  %v189 = vsel %vm177, %v167, %v170
  %v190 = vsel %vm180, %v176, 1326507024
  %v191 = vsel %vm179, %v173, %v190
  %v192 = vsel %vm178, %v189, %v191
  %v193 = vshll.u32 %v153, 8
  %v194 = vmul.u32.u64.compose %v193, %v192
  %v195 = vextract.low.u32 %v194
  %v196 = vextract.high.u32 %v194
  %v197 = vmul.u32.u64.compose %v193, %v188
  %v198 = vextract.low.u32 %v197
  %v199 = vextract.high.u32 %v197
  %v200 = vmul.u32 %v193, %v184
  %v201 = vadd.s32 %v196, %v198
  %vm202 = vc.u32 %v196, %v198
  %v203 = vadd.s32 %v199, 1
  %v204 = vsel %vm202, %v203, %v199
  %v205 = vadd.s32 %v200, %v204
  %v206 = vadd.s32 %v205, 536870912
  %v207 = vshrl.u32 %v206, 30
  %v208 = vshll.u32 %v207, 30
  %v209 = vsub.s32 %v205, %v208
  %vm210 = vcmp.lt.s32.totalorder %v209, 0
  %v211 = vsub.s32 0, %v209
  %v212 = vsel %vm210, %v211, %v209
  %v213 = vclz %v212
  %v214 = vsub.s32 %v213, 2
  %vm215 = vcmp.gt.s32.totalorder 0, %v214
  %v216 = vsel %vm215, 0, %v214
  %v217 = vsub.s32 32, %v216
  %v218 = vshll.u32 %v209, %v216
  %v219 = vshrl.u32 %v201, %v217
  %v220 = vor.u32 %v218, %v219
  %v221 = vsub.s32 4294967266, %v216
  %v222 = vadd.s32 %v221, 127
  %v223 = vshll.u32 %v222, 23
  %v224 = vor.u32 4788187, %v223
  %v225 = vand.u32 2147483647, %v224
  %v227 = vcvt.s32.f32 %v220
  %v228 = vmul.f32 %v227, %v225
  %v229 = vxor.u32 %v228, 2147483648
  %v230 = vsel %vm147, %v229, %v228
  %v231 = vsub.s32 4, %v207
  %v232 = vsel %vm147, %v231, %v207
  %v233 = vsel %vm146, %v30, %v230
  %v234 = vsel %vm146, 0, %v232
  %v235 = vcosq.f32.pop %v233
  %v236 = vsinq.f32.pop %v233
  %vm237 = vweird.f32 %v30
  %v238 = vadd.s32 %v234, 3
  %v239 = vand.u32 %v238, 3
  %vm240 = vcmp.lt.s32.totalorder %v239, 2
  %vm241 = vcmp.eq.s32.totalorder %v239, 0
  %v242 = vxor.u32 %v236, 2147483648
  %v243 = vsel %vm241, %v235, %v242
  %vm244 = vcmp.eq.s32.totalorder %v239, 2
  %v245 = vxor.u32 %v235, 2147483648
  %v246 = vsel %vm244, %v245, %v236
  %v247 = vsel %vm240, %v243, %v246
  %v248 = vsel %vm237, nan, %v247
  %v249 = vmul.f32 %v248, %v34
  %v250 = vsel %vm31, %v144, %v249
  %v251 = vmul.f32 %v250, 0.5
  %v252 = vsub.f32 1.0, %v142
  %v253 = vmul.f32 %v34, %v34
  %v254 = vmul.f32 %v252, %v253
  %v255 = vsel %vm31, %v251, %v254
  %v256 = vmul.f32 %v255, %v14
  %v257 = vmul.f32 %v255, %v16
  %v258 = vmul.f32 %v255, %v18
  %v259 = vmul.f32 %v250, %v14
  %v260 = vmul.f32 %v250, %v16
  %v261 = vmul.f32 %v250, %v18
  %v262 = vmul.f32 %v256, %v14
  %v263 = vadd.f32 %v262, %v142
  %264 = vst [vmem:[%s1] sm:$0xff] %v263
  %v265 = vmul.f32 %v256, %v16
  %v266 = vsub.f32 %v265, %v261
  %s267 = scalar_lea.vmem %s1, 8
  %268 = vst [vmem:[%s267] sm:$0xff] %v266
  %v269 = vmul.f32 %v256, %v18
  %v270 = vadd.f32 %v269, %v260
  %s271 = scalar_lea.vmem %s1, 16
  %272 = vst [vmem:[%s271] sm:$0xff] %v270
  %s273 = scalar_lea.vmem %s1, 24
  %274 = vst [vmem:[%s273] sm:$0xff] %v8
  %v275 = vmul.f32 %v257, %v14
  %v276 = vadd.f32 %v275, %v261
  %s277 = scalar_lea.vmem %s1, 32
  %278 = vst [vmem:[%s277] sm:$0xff] %v276
  %v279 = vmul.f32 %v257, %v16
  %v280 = vadd.f32 %v279, %v142
  %s281 = scalar_lea.vmem %s1, 40
  %282 = vst [vmem:[%s281] sm:$0xff] %v280
  %v283 = vmul.f32 %v257, %v18
  %v284 = vsub.f32 %v283, %v259
  %s285 = scalar_lea.vmem %s1, 48
  %286 = vst [vmem:[%s285] sm:$0xff] %v284
  %s287 = scalar_lea.vmem %s1, 56
  %288 = vst [vmem:[%s287] sm:$0xff] %v10
  %v289 = vmul.f32 %v258, %v14
  %v290 = vsub.f32 %v289, %v260
  %s291 = scalar_lea.vmem %s1, 64
  %292 = vst [vmem:[%s291] sm:$0xff] %v290
  %v293 = vmul.f32 %v258, %v16
  %v294 = vadd.f32 %v293, %v259
  %s295 = scalar_lea.vmem %s1, 72
  %296 = vst [vmem:[%s295] sm:$0xff] %v294
  %v297 = vmul.f32 %v258, %v18
  %v298 = vadd.f32 %v297, %v142
  %s299 = scalar_lea.vmem %s1, 80
  %300 = vst [vmem:[%s299] sm:$0xff] %v298
  %s301 = scalar_lea.vmem %s1, 88
  %302 = vst [vmem:[%s301] sm:$0xff] %v12
  // Predicated region
  $region6: #{_forward_so3xr3.1} parent=0 // pred_check
    _
  $region7: #{_forward_so3xr3.1} parent=0 // pred_check_branch
    %304 = sbr.rel (0) target = $region9
  $region8: #{_forward_so3xr3.1} parent=0 // pred_region
    _
  $region9: #{_forward_so3xr3.1} parent=0 // pred_fallthru
    _
  // Predicated region
  $region10: #{_forward_so3xr3.1} parent=0 // pred_check
    _
  $region11: #{_forward_so3xr3.1} parent=0 // pred_check_branch
    %306 = sbr.rel (0) target = $region13
  $region12: #{_forward_so3xr3.1} parent=0 // pred_region
    _
  $region13: #{_forward_so3xr3.1} parent=0 // pred_fallthru
    _

</llo_original>
